<compile_context>
chip_gen: v7x
topology: tpu7x:2x2x1
jax: 0.10.0
libtpu: 0.0.40
codegen_flags: <defaults>
</compile_context>

<pallas_src>
import functools

import jax
import jax.numpy as jnp
import numpy as np
from jax import lax
from jax.experimental import pallas as pl
from jax.experimental.pallas import tpu as pltpu


def paconv_kernel(x_ref, wcat_ref, b2_ref, w4_ref, out_ref, *, H, W):
    # x_ref    : (C, L)    L = images_per_step * H*W ; channels in sublanes,
    #                      pixels (image-major, row-major) in lanes
    # wcat_ref : (2C, 9C)  rows [0:C]  = k3 flattened (Cout, 9*Cin), tap-major
    #                      rows [C:2C] = k2 1x1 weight embedded in center-tap cols
    # b2_ref   : (C, 1)    k2 bias
    # w4_ref   : (C, 9C)   k4 flattened (Cout, 9*Cin), tap-major
    # out_ref  : (C, L)
    C, L = out_ref.shape
    HW = H * W

    x = x_ref[...]
    wcat = wcat_ref[...]
    b2 = b2_ref[...]
    w4 = w4_ref[...]

    # ---- border-validity masks, built once from a (1, L) iota -----------------
    # valid(dy,dx)[n] == True iff tap pixel (h+dy-1, w+dx-1) lies inside the image
    # that owns flattened pixel n.  These masks also zero roll wrap-around at the
    # flat-array ends and any cross-image reads, so no halo buffer is needed.
    n = lax.broadcasted_iota(jnp.int32, (1, L), 1)
    p = (n & (HW - 1)) if (HW & (HW - 1)) == 0 else (n % HW)   # pixel idx in image
    w_i = (p & (W - 1)) if (W & (W - 1)) == 0 else (p % W)     # column idx
    row_ok = [p >= W, None, p < (H - 1) * W]     # dy = 0, 1, 2
    col_ok = [w_i >= 1, None, w_i <= W - 2]      # dx = 0, 1, 2
    masks = []
    for dy in range(3):
        for dx in range(3):
            m = row_ok[dy]
            if col_ok[dx] is not None:
                m = col_ok[dx] if m is None else m & col_ok[dx]
            masks.append(m)                      # None == center tap, always valid

    def im2col(v):
        # Stack the 9 masked, lane-shifted taps along the sublane axis -> (9C, L).
        taps = []
        for dy in range(3):
            for dx in range(3):
                off = (dy - 1) * W + (dx - 1)    # flat shift of the source pixel
                # center tap: use the in-register value directly (no roll)
                t = v if off == 0 else pltpu.roll(v, shift=(-off) % L, axis=1)
                m = masks[dy * 3 + dx]
                if m is not None:
                    t = jnp.where(m, t, 0.0)
                taps.append(t)
        return jnp.concatenate(taps, axis=0)

    # ---- fused matmul: conv3x3(x) and conv1x1(x) in one MXU push ---------------
    fused = jnp.dot(wcat, im2col(x), preferred_element_type=jnp.float32)  # (2C, L)
    y = jax.nn.sigmoid(fused[C:, :] + b2)        # pixel attention
    prod = fused[:C, :] * y

    # ---- k4: second 3x3 conv on the attended product ---------------------------
    out_ref[...] = jnp.dot(w4, im2col(prod),
                           preferred_element_type=jnp.float32).astype(out_ref.dtype)


def _num_grid_steps(batch):
    """2 balanced 'parallel' steps for dual-TensorCore chips, 1 fat step otherwise."""
    try:
        kind = jax.devices()[0].device_kind.lower()
    except Exception:
        kind = ""
    single_core = any(t in kind for t in
                      ("v2", "v3", "v5 lite", "v5e", "v6 lite", "v6e"))
    if batch <= 1 or single_core:
        return 1
    return 2


@functools.partial(jax.jit, static_argnames="n_steps")
def _paconv_pallas(x_nchw, W2, b2, W3, W4, n_steps):
    B, C, H, W = x_nchw.shape
    HW = H * W
    imgs = -(-B // n_steps)                      # images per grid step
    Bp = imgs * n_steps
    if Bp != B:                                  # pad batch to a multiple of n_steps
        x_nchw = jnp.concatenate(
            [x_nchw, jnp.zeros((Bp - B, C, H, W), x_nchw.dtype)], axis=0)
    L = imgs * HW                                # lane extent per step (256 or 512 here)

    # activations: (n_steps, C, L); per channel the lanes hold [img0 px, img1 px, ...]
    x_flat = (x_nchw.reshape(n_steps, imgs, C, HW)
              .transpose(0, 2, 1, 3)
              .reshape(n_steps, C, L))

    # weights: flatten to tap-major (Cout, 9*Cin); embed the 1x1 weight in the
    # center-tap columns and stack under w3 so one matmul produces both convs.
    w3_flat = jnp.transpose(W3, (0, 2, 3, 1)).reshape(C, 9 * C)
    w4_flat = jnp.transpose(W4, (0, 2, 3, 1)).reshape(C, 9 * C)
    w2_embed = jnp.zeros((C, 9 * C), jnp.float32).at[:, 4 * C:5 * C].set(W2[:, :, 0, 0])
    wcat = jnp.concatenate([w3_flat, w2_embed], axis=0)          # (2C, 9C)
    b2c = b2.reshape(C, 1)

    cost = pl.CostEstimate(
        flops=2 * 27 * C * C * Bp * HW,          # (2C,9C)@(9C,L) + (C,9C)@(9C,L)
        transcendentals=Bp * C * HW,             # sigmoid
        bytes_accessed=4 * (2 * Bp * C * HW + 3 * 9 * C * C + C),
    )

    out = pl.pallas_call(
        functools.partial(paconv_kernel, H=H, W=W),
        grid=(n_steps,),
        in_specs=[
            pl.BlockSpec((None, C, L), lambda s: (s, 0, 0)),
            pl.BlockSpec((2 * C, 9 * C), lambda s: (0, 0)),
            pl.BlockSpec((C, 1), lambda s: (0, 0)),
            pl.BlockSpec((C, 9 * C), lambda s: (0, 0)),
        ],
        out_specs=pl.BlockSpec((None, C, L), lambda s: (s, 0, 0)),
        out_shape=jax.ShapeDtypeStruct((n_steps, C, L), jnp.float32),
        compiler_params=pltpu.CompilerParams(
            dimension_semantics=("parallel",),   # steps split across TCs on v4/v5p/v7x
        ),
        cost_estimate=cost,
    )(x_flat, wcat, b2c, w4_flat)

    out = (out.reshape(n_steps, C, imgs, HW)
           .transpose(0, 2, 1, 3)
           .reshape(Bp, C, H, W))
    return out[:B]


def paconv_pallas(x_nchw, W2, b2, W3, W4):
    """x_nchw: (B, C, H, W) float32 (PyTorch layout).  Returns (B, C, H, W)."""
    return _paconv_pallas(x_nchw, W2, b2, W3, W4,
                          n_steps=_num_grid_steps(x_nchw.shape[0]))


def paconv_reference(x_nchw, W2, b2, W3, W4):
    """Pure-JAX NCHW reference mirroring the PyTorch module exactly."""
    dn = ("NCHW", "OIHW", "NCHW")
    y = lax.conv_general_dilated(x_nchw, W2, (1, 1), [(0, 0), (0, 0)],
                                 dimension_numbers=dn) + b2.reshape(1, -1, 1, 1)
    y = jax.nn.sigmoid(y)
    k3 = lax.conv_general_dilated(x_nchw, W3, (1, 1), [(1, 1), (1, 1)],
                                  dimension_numbers=dn)
    out = lax.conv_general_dilated(k3 * y, W4, (1, 1), [(1, 1), (1, 1)],
                                   dimension_numbers=dn)
    return out


if __name__ == "__main__":
    nf = 4            # channels (nf in the PyTorch module)
    B, H, W = 2, 16, 16
    k_size = 3

    key = jax.random.PRNGKey(0)
    kx, k2w, k2b, k3w, k4w = jax.random.split(key, 5)

    x_nchw = jax.random.normal(kx, (B, nf, H, W), jnp.float32)
    W2 = 0.2 * jax.random.normal(k2w, (nf, nf, 1, 1), jnp.float32)   # k2 weight
    b2 = 0.1 * jax.random.normal(k2b, (nf,), jnp.float32)            # k2 bias
    W3 = 0.2 * jax.random.normal(k3w, (nf, nf, k_size, k_size), jnp.float32)
    W4 = 0.2 * jax.random.normal(k4w, (nf, nf, k_size, k_size), jnp.float32)

    out = jax.block_until_ready(paconv_pallas(x_nchw, W2, b2, W3, W4))
    ref = jax.block_until_ready(paconv_reference(x_nchw, W2, b2, W3, W4))

    np.testing.assert_allclose(np.asarray(out), np.asarray(ref),
                               rtol=5e-4, atol=5e-4)
    print("KERNEL_OK")
</pallas_src>

<mosaic_0001>
module attributes {stable_mosaic.version = 11 : i64} {
  func.func @paconv_kernel(%arg0: i32, %arg1: memref<1x4x256xf32, #tpu.memory_space<vmem>>, %arg2: memref<8x36xf32, #tpu.memory_space<vmem>>, %arg3: memref<4x1xf32, #tpu.memory_space<vmem>>, %arg4: memref<4x36xf32, #tpu.memory_space<vmem>>, %arg5: memref<1x4x256xf32, #tpu.memory_space<vmem>>) attributes {dimension_semantics = [#tpu.dimension_semantics<parallel>], iteration_bounds = array<i64: 2>, scalar_prefetch = 0 : i64, scratch_operands = 0 : i64, tpu.core_type = #tpu.core_type<tc>, window_params = [{transform_indices = @transform_0, window_bounds = array<i64: 1, 4, 256>}, {pipeline_mode = #tpu.pipeline_mode<synchronous>, transform_indices = @transform_1, window_bounds = array<i64: 8, 36>}, {pipeline_mode = #tpu.pipeline_mode<synchronous>, transform_indices = @transform_2, window_bounds = array<i64: 4, 1>}, {pipeline_mode = #tpu.pipeline_mode<synchronous>, transform_indices = @transform_3, window_bounds = array<i64: 4, 36>}, {transform_indices = @transform_4, window_bounds = array<i64: 1, 4, 256>}]} {
    %c0 = arith.constant 0 : index
    %c0_0 = arith.constant 0 : index
    %c0_1 = arith.constant 0 : index
    %0 = vector.load %arg1[%c0, %c0_0, %c0_1] : memref<1x4x256xf32, #tpu.memory_space<vmem>>, vector<1x4x256xf32>
    %1 = vector.shape_cast %0 : vector<1x4x256xf32> to vector<4x256xf32>
    %c0_2 = arith.constant 0 : index
    %c0_3 = arith.constant 0 : index
    %2 = vector.load %arg2[%c0_2, %c0_3] : memref<8x36xf32, #tpu.memory_space<vmem>>, vector<8x36xf32>
    %c0_4 = arith.constant 0 : index
    %c0_5 = arith.constant 0 : index
    %3 = vector.load %arg3[%c0_4, %c0_5] : memref<4x1xf32, #tpu.memory_space<vmem>>, vector<4x1xf32>
    %c0_6 = arith.constant 0 : index
    %c0_7 = arith.constant 0 : index
    %4 = vector.load %arg4[%c0_6, %c0_7] : memref<4x36xf32, #tpu.memory_space<vmem>>, vector<4x36xf32>
    %5 = tpu.iota {dimensions = array<i32: 1>} : vector<1x256xi32>
    %c255_i32 = arith.constant 255 : i32
    %6 = vector.broadcast %c255_i32 : i32 to vector<1x256xi32>
    %7 = arith.andi %5, %6 : vector<1x256xi32>
    %c15_i32 = arith.constant 15 : i32
    %8 = vector.broadcast %c15_i32 : i32 to vector<1x256xi32>
    %9 = arith.andi %7, %8 : vector<1x256xi32>
    %c16_i32 = arith.constant 16 : i32
    %10 = vector.broadcast %c16_i32 : i32 to vector<1x256xi32>
    %11 = arith.cmpi sge, %7, %10 : vector<1x256xi32>
    %c240_i32 = arith.constant 240 : i32
    %12 = vector.broadcast %c240_i32 : i32 to vector<1x256xi32>
    %13 = arith.cmpi slt, %7, %12 : vector<1x256xi32>
    %c1_i32 = arith.constant 1 : i32
    %14 = vector.broadcast %c1_i32 : i32 to vector<1x256xi32>
    %15 = arith.cmpi sge, %9, %14 : vector<1x256xi32>
    %c14_i32 = arith.constant 14 : i32
    %16 = vector.broadcast %c14_i32 : i32 to vector<1x256xi32>
    %17 = arith.cmpi sle, %9, %16 : vector<1x256xi32>
    %18 = arith.andi %11, %15 : vector<1x256xi1>
    %19 = arith.andi %11, %17 : vector<1x256xi1>
    %20 = arith.andi %13, %15 : vector<1x256xi1>
    %21 = arith.andi %13, %17 : vector<1x256xi1>
    %c17_i32 = arith.constant 17 : i32
    %22 = tpu.dynamic_rotate %1 by %c17_i32 dim 1 : vector<4x256xf32>, i32 -> vector<4x256xf32>
    %cst = arith.constant 0.000000e+00 : f32
    %23 = vector.shape_cast %18 : vector<1x256xi1> to vector<1x256xi1>
    %24 = vector.broadcast %23 : vector<1x256xi1> to vector<4x256xi1>
    %25 = vector.broadcast %cst : f32 to vector<4x256xf32>
    %26 = arith.select %24, %22, %25 : vector<4x256xi1>, vector<4x256xf32>
    %c16_i32_8 = arith.constant 16 : i32
    %27 = tpu.dynamic_rotate %1 by %c16_i32_8 dim 1 : vector<4x256xf32>, i32 -> vector<4x256xf32>
    %cst_9 = arith.constant 0.000000e+00 : f32
    %28 = vector.shape_cast %11 : vector<1x256xi1> to vector<1x256xi1>
    %29 = vector.broadcast %28 : vector<1x256xi1> to vector<4x256xi1>
    %30 = vector.broadcast %cst_9 : f32 to vector<4x256xf32>
    %31 = arith.select %29, %27, %30 : vector<4x256xi1>, vector<4x256xf32>
    %c15_i32_10 = arith.constant 15 : i32
    %32 = tpu.dynamic_rotate %1 by %c15_i32_10 dim 1 : vector<4x256xf32>, i32 -> vector<4x256xf32>
    %cst_11 = arith.constant 0.000000e+00 : f32
    %33 = vector.shape_cast %19 : vector<1x256xi1> to vector<1x256xi1>
    %34 = vector.broadcast %33 : vector<1x256xi1> to vector<4x256xi1>
    %35 = vector.broadcast %cst_11 : f32 to vector<4x256xf32>
    %36 = arith.select %34, %32, %35 : vector<4x256xi1>, vector<4x256xf32>
    %c1_i32_12 = arith.constant 1 : i32
    %37 = tpu.dynamic_rotate %1 by %c1_i32_12 dim 1 : vector<4x256xf32>, i32 -> vector<4x256xf32>
    %cst_13 = arith.constant 0.000000e+00 : f32
    %38 = vector.shape_cast %15 : vector<1x256xi1> to vector<1x256xi1>
    %39 = vector.broadcast %38 : vector<1x256xi1> to vector<4x256xi1>
    %40 = vector.broadcast %cst_13 : f32 to vector<4x256xf32>
    %41 = arith.select %39, %37, %40 : vector<4x256xi1>, vector<4x256xf32>
    %c255_i32_14 = arith.constant 255 : i32
    %42 = tpu.dynamic_rotate %1 by %c255_i32_14 dim 1 : vector<4x256xf32>, i32 -> vector<4x256xf32>
    %cst_15 = arith.constant 0.000000e+00 : f32
    %43 = vector.shape_cast %17 : vector<1x256xi1> to vector<1x256xi1>
    %44 = vector.broadcast %43 : vector<1x256xi1> to vector<4x256xi1>
    %45 = vector.broadcast %cst_15 : f32 to vector<4x256xf32>
    %46 = arith.select %44, %42, %45 : vector<4x256xi1>, vector<4x256xf32>
    %c241_i32 = arith.constant 241 : i32
    %47 = tpu.dynamic_rotate %1 by %c241_i32 dim 1 : vector<4x256xf32>, i32 -> vector<4x256xf32>
    %cst_16 = arith.constant 0.000000e+00 : f32
    %48 = vector.shape_cast %20 : vector<1x256xi1> to vector<1x256xi1>
    %49 = vector.broadcast %48 : vector<1x256xi1> to vector<4x256xi1>
    %50 = vector.broadcast %cst_16 : f32 to vector<4x256xf32>
    %51 = arith.select %49, %47, %50 : vector<4x256xi1>, vector<4x256xf32>
    %c240_i32_17 = arith.constant 240 : i32
    %52 = tpu.dynamic_rotate %1 by %c240_i32_17 dim 1 : vector<4x256xf32>, i32 -> vector<4x256xf32>
    %cst_18 = arith.constant 0.000000e+00 : f32
    %53 = vector.shape_cast %13 : vector<1x256xi1> to vector<1x256xi1>
    %54 = vector.broadcast %53 : vector<1x256xi1> to vector<4x256xi1>
    %55 = vector.broadcast %cst_18 : f32 to vector<4x256xf32>
    %56 = arith.select %54, %52, %55 : vector<4x256xi1>, vector<4x256xf32>
    %c239_i32 = arith.constant 239 : i32
    %57 = tpu.dynamic_rotate %1 by %c239_i32 dim 1 : vector<4x256xf32>, i32 -> vector<4x256xf32>
    %cst_19 = arith.constant 0.000000e+00 : f32
    %58 = vector.shape_cast %21 : vector<1x256xi1> to vector<1x256xi1>
    %59 = vector.broadcast %58 : vector<1x256xi1> to vector<4x256xi1>
    %60 = vector.broadcast %cst_19 : f32 to vector<4x256xf32>
    %61 = arith.select %59, %57, %60 : vector<4x256xi1>, vector<4x256xf32>
    %62 = tpu.concatenate %26, %31, %36, %41, %1, %46, %51, %56, %61 in 0 : vector<4x256xf32>, vector<4x256xf32>, vector<4x256xf32>, vector<4x256xf32>, vector<4x256xf32>, vector<4x256xf32>, vector<4x256xf32>, vector<4x256xf32>, vector<4x256xf32> -> vector<36x256xf32>
    %cst_20 = arith.constant dense<0.000000e+00> : vector<8x256xf32>
    %63 = tpu.matmul %2, %62, %cst_20 {dimension_numbers = #tpu.dot_dimension_numbers<[1], [0], [0], [1], [0, 0, 1, 1], [], []>} : vector<8x36xf32>, vector<36x256xf32>, vector<8x256xf32> -> vector<8x256xf32>
    %64 = vector.extract_strided_slice %63 {offsets = [4, 0], sizes = [4, 256], strides = [1, 1]} : vector<8x256xf32> to vector<4x256xf32>
    %65 = vector.broadcast %3 : vector<4x1xf32> to vector<4x256xf32>
    %66 = arith.addf %64, %65 : vector<4x256xf32>
    %67 = arith.negf %66 : vector<4x256xf32>
    %68 = math.exp %67 : vector<4x256xf32>
    %cst_21 = arith.constant 1.000000e+00 : f32
    %69 = vector.broadcast %cst_21 : f32 to vector<4x256xf32>
    %70 = arith.addf %69, %68 : vector<4x256xf32>
    %71 = arith.divf %69, %70 : vector<4x256xf32>
    %72 = vector.extract_strided_slice %63 {offsets = [0, 0], sizes = [4, 256], strides = [1, 1]} : vector<8x256xf32> to vector<4x256xf32>
    %73 = arith.mulf %72, %71 : vector<4x256xf32>
    %c17_i32_22 = arith.constant 17 : i32
    %74 = tpu.dynamic_rotate %73 by %c17_i32_22 dim 1 : vector<4x256xf32>, i32 -> vector<4x256xf32>
    %cst_23 = arith.constant 0.000000e+00 : f32
    %75 = vector.shape_cast %18 : vector<1x256xi1> to vector<1x256xi1>
    %76 = vector.broadcast %75 : vector<1x256xi1> to vector<4x256xi1>
    %77 = vector.broadcast %cst_23 : f32 to vector<4x256xf32>
    %78 = arith.select %76, %74, %77 : vector<4x256xi1>, vector<4x256xf32>
    %c16_i32_24 = arith.constant 16 : i32
    %79 = tpu.dynamic_rotate %73 by %c16_i32_24 dim 1 : vector<4x256xf32>, i32 -> vector<4x256xf32>
    %cst_25 = arith.constant 0.000000e+00 : f32
    %80 = vector.shape_cast %11 : vector<1x256xi1> to vector<1x256xi1>
    %81 = vector.broadcast %80 : vector<1x256xi1> to vector<4x256xi1>
    %82 = vector.broadcast %cst_25 : f32 to vector<4x256xf32>
    %83 = arith.select %81, %79, %82 : vector<4x256xi1>, vector<4x256xf32>
    %c15_i32_26 = arith.constant 15 : i32
    %84 = tpu.dynamic_rotate %73 by %c15_i32_26 dim 1 : vector<4x256xf32>, i32 -> vector<4x256xf32>
    %cst_27 = arith.constant 0.000000e+00 : f32
    %85 = vector.shape_cast %19 : vector<1x256xi1> to vector<1x256xi1>
    %86 = vector.broadcast %85 : vector<1x256xi1> to vector<4x256xi1>
    %87 = vector.broadcast %cst_27 : f32 to vector<4x256xf32>
    %88 = arith.select %86, %84, %87 : vector<4x256xi1>, vector<4x256xf32>
    %c1_i32_28 = arith.constant 1 : i32
    %89 = tpu.dynamic_rotate %73 by %c1_i32_28 dim 1 : vector<4x256xf32>, i32 -> vector<4x256xf32>
    %cst_29 = arith.constant 0.000000e+00 : f32
    %90 = vector.shape_cast %15 : vector<1x256xi1> to vector<1x256xi1>
    %91 = vector.broadcast %90 : vector<1x256xi1> to vector<4x256xi1>
    %92 = vector.broadcast %cst_29 : f32 to vector<4x256xf32>
    %93 = arith.select %91, %89, %92 : vector<4x256xi1>, vector<4x256xf32>
    %c255_i32_30 = arith.constant 255 : i32
    %94 = tpu.dynamic_rotate %73 by %c255_i32_30 dim 1 : vector<4x256xf32>, i32 -> vector<4x256xf32>
    %cst_31 = arith.constant 0.000000e+00 : f32
    %95 = vector.shape_cast %17 : vector<1x256xi1> to vector<1x256xi1>
    %96 = vector.broadcast %95 : vector<1x256xi1> to vector<4x256xi1>
    %97 = vector.broadcast %cst_31 : f32 to vector<4x256xf32>
    %98 = arith.select %96, %94, %97 : vector<4x256xi1>, vector<4x256xf32>
    %c241_i32_32 = arith.constant 241 : i32
    %99 = tpu.dynamic_rotate %73 by %c241_i32_32 dim 1 : vector<4x256xf32>, i32 -> vector<4x256xf32>
    %cst_33 = arith.constant 0.000000e+00 : f32
    %100 = vector.shape_cast %20 : vector<1x256xi1> to vector<1x256xi1>
    %101 = vector.broadcast %100 : vector<1x256xi1> to vector<4x256xi1>
    %102 = vector.broadcast %cst_33 : f32 to vector<4x256xf32>
    %103 = arith.select %101, %99, %102 : vector<4x256xi1>, vector<4x256xf32>
    %c240_i32_34 = arith.constant 240 : i32
    %104 = tpu.dynamic_rotate %73 by %c240_i32_34 dim 1 : vector<4x256xf32>, i32 -> vector<4x256xf32>
    %cst_35 = arith.constant 0.000000e+00 : f32
    %105 = vector.shape_cast %13 : vector<1x256xi1> to vector<1x256xi1>
    %106 = vector.broadcast %105 : vector<1x256xi1> to vector<4x256xi1>
    %107 = vector.broadcast %cst_35 : f32 to vector<4x256xf32>
    %108 = arith.select %106, %104, %107 : vector<4x256xi1>, vector<4x256xf32>
    %c239_i32_36 = arith.constant 239 : i32
    %109 = tpu.dynamic_rotate %73 by %c239_i32_36 dim 1 : vector<4x256xf32>, i32 -> vector<4x256xf32>
    %cst_37 = arith.constant 0.000000e+00 : f32
    %110 = vector.shape_cast %21 : vector<1x256xi1> to vector<1x256xi1>
    %111 = vector.broadcast %110 : vector<1x256xi1> to vector<4x256xi1>
    %112 = vector.broadcast %cst_37 : f32 to vector<4x256xf32>
    %113 = arith.select %111, %109, %112 : vector<4x256xi1>, vector<4x256xf32>
    %114 = tpu.concatenate %78, %83, %88, %93, %73, %98, %103, %108, %113 in 0 : vector<4x256xf32>, vector<4x256xf32>, vector<4x256xf32>, vector<4x256xf32>, vector<4x256xf32>, vector<4x256xf32>, vector<4x256xf32>, vector<4x256xf32>, vector<4x256xf32> -> vector<36x256xf32>
    %cst_38 = arith.constant dense<0.000000e+00> : vector<4x256xf32>
    %115 = tpu.matmul %4, %114, %cst_38 {dimension_numbers = #tpu.dot_dimension_numbers<[1], [0], [0], [1], [0, 0, 1, 1], [], []>} : vector<4x36xf32>, vector<36x256xf32>, vector<4x256xf32> -> vector<4x256xf32>
    %c0_39 = arith.constant 0 : index
    %c0_40 = arith.constant 0 : index
    %c0_41 = arith.constant 0 : index
    %116 = vector.load %arg5[%c0_39, %c0_40, %c0_41] : memref<1x4x256xf32, #tpu.memory_space<vmem>>, vector<1x4x256xf32>
    %117 = vector.shape_cast %116 : vector<1x4x256xf32> to vector<4x256xf32>
    %118 = vector.shape_cast %115 : vector<4x256xf32> to vector<1x4x256xf32>
    tpu.vector_store %arg5[%c0_39, %c0_40, %c0_41], %118 {strides = array<i32>} : memref<1x4x256xf32, #tpu.memory_space<vmem>>, vector<1x4x256xf32>,
    return
  }
  func.func @transform_0(%arg0: i32) -> (i32, i32, i32) {
    %c0_i32 = arith.constant 0 : i32
    %c0_i32_0 = arith.constant 0 : i32
    %c0_i32_1 = arith.constant 0 : i32
    return %arg0, %c0_i32, %c0_i32_0 : i32, i32, i32
  }
  func.func @transform_1(%arg0: i32) -> (i32, i32) {
    %c0_i32 = arith.constant 0 : i32
    %c0_i32_0 = arith.constant 0 : i32
    %c0_i32_1 = arith.constant 0 : i32
    return %c0_i32, %c0_i32_0 : i32, i32
  }
  func.func @transform_2(%arg0: i32) -> (i32, i32) {
    %c0_i32 = arith.constant 0 : i32
    %c0_i32_0 = arith.constant 0 : i32
    %c0_i32_1 = arith.constant 0 : i32
    return %c0_i32, %c0_i32_0 : i32, i32
  }
  func.func @transform_3(%arg0: i32) -> (i32, i32) {
    %c0_i32 = arith.constant 0 : i32
    %c0_i32_0 = arith.constant 0 : i32
    %c0_i32_1 = arith.constant 0 : i32
    return %c0_i32, %c0_i32_0 : i32, i32
  }
  func.func @transform_4(%arg0: i32) -> (i32, i32, i32) {
    %c0_i32 = arith.constant 0 : i32
    %c0_i32_0 = arith.constant 0 : i32
    %c0_i32_1 = arith.constant 0 : i32
    return %arg0, %c0_i32, %c0_i32_0 : i32, i32, i32
  }
}

</mosaic_0001>

<llo_original>
// kernel: _paconv_pallas.1
$region0: #{_paconv_pallas.1}
  #allocation0 [shape = 'u32[]', space=smem, size = 0x4, offset = 0x4, fixed_abs, tag = 'smem constant byte address 0x4 - core index']
  #allocation1 [shape = 'u32[144,128]{1,0:T(1,128)}', space=vmem, size = 0x12000, scoped, tag = 'internal scratch']
  %s0 = inlined_call_operand.vmem [shape: f32[2,4,256], index: 0, kind: input, shape index: {}]
  %s1 = inlined_call_operand.vmem [shape: f32[8,36], index: 1, kind: input, shape index: {}]
  %s2 = inlined_call_operand.vmem [shape: f32[4,1], index: 2, kind: input, shape index: {}]
  %s3 = inlined_call_operand.vmem [shape: f32[4,36], index: 3, kind: input, shape index: {}]
  %s4 = inlined_call_operand.vmem [shape: f32[2,4,256], index: 4, kind: output, shape index: {}]
  %s5 = sld [smem:[#allocation0]]
  $region49: #{_paconv_pallas.1} parent=0
    _
  %s7 = ssub.s32 1, %s5
  %s8 = scalar_select 0, %s7, %s5
  loop: start=0, step=1, limit=4
  $region2: #{_paconv_pallas.1} parent=0 // loop_pre_header
    _
  $region3: #{_paconv_pallas.1} parent=0 // loop_header
    %s10 = sphi 0, %s14
    %p11 = scmp.ge.s32.totalorder %s10, 4
    %s20 = sphi 0, %s22
    %s23 = sphi 0, %s20
    %s24 = sphi 0, %s23
    %s40 = sphi 0, %s24
    %s44 = sphi 0, %s44
    %s46 = sphi 0, %s44
    %s47 = sphi 0, %s46
    %s61 = sphi 0, %s47
    %s65 = sphi 0, %s65
    %s67 = sphi 0, %s65
    %s68 = sphi 0, %s67
    %s82 = sphi 0, %s68
    %s86 = sphi 0, %s86
    %s88 = sphi 0, %s86
    %s89 = sphi 0, %s88
    %s103 = sphi 0, %s89
    %s109 = sphi 0, %s111
    %s112 = sphi 0, %s109
    %s113 = sphi 0, %s112
    %s129 = sphi 0, %s113
  $region4: #{_paconv_pallas.1} parent=0 // loop_header_branch
    %13 = sbr.rel (%p11) target = $region8
  $region5: #{_paconv_pallas.1} parent=0 // loop_body
    %s15 = ssub.s32 %s10, 1
    %s16 = ssub.s32 %s10, 2
    %s17 = sadd.s32 %s10, 1
    %s18 = ssub.s32 %s10, %s17
    %p19 = scmp.eq.s32.totalorder %s18, 0
    %s21 = sadd.s32 %s20, 1
    %s22 = scalar_select %p19, %s20, %s21
    %p25 = pneg %p19
    %p26 = scmp.eq.s32.totalorder %s10, 1
    %p27 = por %p25, %p26
    %p28 = scmp.ne.s32.totalorder %s20, %s23
    %p29 = scmp.eq.s32.totalorder %s10, 0
    %p30 = por %p28, %p29
    %p31 = scmp.ne.s32.totalorder %s20, %s23
    %p32 = scmp.eq.s32.totalorder %s15, 1
    %p33 = por %p31, %p32
    %p34 = scmp.ne.s32.totalorder %s23, %s24
    %p35 = scmp.eq.s32.totalorder %s15, 0
    %p36 = por %p34, %p35
    %p37 = scmp.ne.s32.totalorder %s23, %s24
    %p38 = scmp.eq.s32.totalorder %s16, 1
    %p39 = por %p37, %p38
    %p41 = scmp.ne.s32.totalorder %s24, %s40
    %p42 = scmp.eq.s32.totalorder %s16, 0
    %p43 = por %p41, %p42
    %s45 = sadd.s32 %s44, 1
    %p48 = scmp.eq.s32.totalorder %s10, 1
    %p49 = scmp.ne.s32.totalorder %s44, %s46
    %p50 = scmp.eq.s32.totalorder %s10, 0
    %p51 = por %p49, %p50
    %p52 = scmp.ne.s32.totalorder %s44, %s46
    %p53 = scmp.eq.s32.totalorder %s15, 1
    %p54 = por %p52, %p53
    %p55 = scmp.ne.s32.totalorder %s46, %s47
    %p56 = scmp.eq.s32.totalorder %s15, 0
    %p57 = por %p55, %p56
    %p58 = scmp.ne.s32.totalorder %s46, %s47
    %p59 = scmp.eq.s32.totalorder %s16, 1
    %p60 = por %p58, %p59
    %p62 = scmp.ne.s32.totalorder %s47, %s61
    %p63 = scmp.eq.s32.totalorder %s16, 0
    %p64 = por %p62, %p63
    %s66 = sadd.s32 %s65, 1
    %p69 = scmp.eq.s32.totalorder %s10, 1
    %p70 = scmp.ne.s32.totalorder %s65, %s67
    %p71 = scmp.eq.s32.totalorder %s10, 0
    %p72 = por %p70, %p71
    %p73 = scmp.ne.s32.totalorder %s65, %s67
    %p74 = scmp.eq.s32.totalorder %s15, 1
    %p75 = por %p73, %p74
    %p76 = scmp.ne.s32.totalorder %s67, %s68
    %p77 = scmp.eq.s32.totalorder %s15, 0
    %p78 = por %p76, %p77
    %p79 = scmp.ne.s32.totalorder %s67, %s68
    %p80 = scmp.eq.s32.totalorder %s16, 1
    %p81 = por %p79, %p80
    %p83 = scmp.ne.s32.totalorder %s68, %s82
    %p84 = scmp.eq.s32.totalorder %s16, 0
    %p85 = por %p83, %p84
    %s87 = sadd.s32 %s86, 1
    %p90 = scmp.eq.s32.totalorder %s10, 1
    %p91 = scmp.ne.s32.totalorder %s86, %s88
    %p92 = scmp.eq.s32.totalorder %s10, 0
    %p93 = por %p91, %p92
    %p94 = scmp.ne.s32.totalorder %s86, %s88
    %p95 = scmp.eq.s32.totalorder %s15, 1
    %p96 = por %p94, %p95
    %p97 = scmp.ne.s32.totalorder %s88, %s89
    %p98 = scmp.eq.s32.totalorder %s15, 0
    %p99 = por %p97, %p98
    %p100 = scmp.ne.s32.totalorder %s88, %s89
    %p101 = scmp.eq.s32.totalorder %s16, 1
    %p102 = por %p100, %p101
    %p104 = scmp.ne.s32.totalorder %s89, %s103
    %p105 = scmp.eq.s32.totalorder %s16, 0
    %p106 = por %p104, %p105
    %s107 = ssub.s32 %s10, %s17
    %p108 = scmp.eq.s32.totalorder %s107, 0
    %s110 = sadd.s32 %s109, 1
    %s111 = scalar_select %p108, %s109, %s110
    %p114 = pneg %p108
    %p115 = scmp.eq.s32.totalorder %s10, 1
    %p116 = por %p114, %p115
    %p117 = scmp.ne.s32.totalorder %s109, %s112
    %p118 = scmp.eq.s32.totalorder %s10, 0
    %p119 = por %p117, %p118
    %p120 = scmp.ne.s32.totalorder %s109, %s112
    %p121 = scmp.eq.s32.totalorder %s15, 1
    %p122 = por %p120, %p121
    %p123 = scmp.ne.s32.totalorder %s112, %s113
    %p124 = scmp.eq.s32.totalorder %s15, 0
    %p125 = por %p123, %p124
    %p126 = scmp.ne.s32.totalorder %s112, %s113
    %p127 = scmp.eq.s32.totalorder %s16, 1
    %p128 = por %p126, %p127
    %p130 = scmp.ne.s32.totalorder %s113, %s129
    %p131 = scmp.eq.s32.totalorder %s16, 0
    %p132 = por %p130, %p131
    %p133 = scmp.le.s32.totalorder 1, %s10
    %p134 = scmp.lt.s32.totalorder %s10, 3
    %p135 = pnand %p133, %p134
    %p136 = pneg %p135
    // Predicated region
    $region9: #{_paconv_pallas.1} parent=5 // pred_check
      _
    $region10: #{_paconv_pallas.1} parent=5 // pred_check_branch
      %138 = sbr.rel (%p135) target = $region12
    $region11: #{_paconv_pallas.1} parent=5 // pred_region
      %s139 = ssub.s32 %s10, 1
      // Predicated region
      $region13: #{_paconv_pallas.1} parent=11 // pred_check
        %p140 = pneg %p57
      $region14: #{_paconv_pallas.1} parent=11 // pred_check_branch
        %142 = sbr.rel (%p140) target = $region16
      $region15: #{_paconv_pallas.1} parent=11 // pred_region
        _
      $region16: #{_paconv_pallas.1} parent=11 // pred_fallthru
        _
      // Predicated region
      $region17: #{_paconv_pallas.1} parent=11 // pred_check
        %p143 = pneg %p78
      $region18: #{_paconv_pallas.1} parent=11 // pred_check_branch
        %145 = sbr.rel (%p143) target = $region20
      $region19: #{_paconv_pallas.1} parent=11 // pred_region
        _
      $region20: #{_paconv_pallas.1} parent=11 // pred_fallthru
        _
      // Predicated region
      $region21: #{_paconv_pallas.1} parent=11 // pred_check
        %p146 = pneg %p99
      $region22: #{_paconv_pallas.1} parent=11 // pred_check_branch
        %148 = sbr.rel (%p146) target = $region24
      $region23: #{_paconv_pallas.1} parent=11 // pred_region
        _
      $region24: #{_paconv_pallas.1} parent=11 // pred_fallthru
        _
    $region12: #{_paconv_pallas.1} parent=5 // pred_fallthru
      _
    %p149 = scmp.lt.s32.totalorder %s10, 2
    // Predicated region
    $region25: #{_paconv_pallas.1} parent=5 // pred_check
      %p150 = pneg %p149
    $region26: #{_paconv_pallas.1} parent=5 // pred_check_branch
      %152 = sbr.rel (%p150) target = $region28
    $region27: #{_paconv_pallas.1} parent=5 // pred_region
      // Predicated region
      $region29: #{_paconv_pallas.1} parent=27 // pred_check
        %p153 = pneg %p30
      $region30: #{_paconv_pallas.1} parent=27 // pred_check_branch
        %155 = sbr.rel (%p153) target = $region32
      $region31: #{_paconv_pallas.1} parent=27 // pred_region
        %p156 = scmp.lt.s32.totalorder %s10, 1
        %s157 = scalar_select %p156, %s10, 1
        %s158 = smul.addr %s157, 2
        %s159 = smul.addr %s158, 4
        %s160 = scalar_lea.vmem %s0, %s159
      $region32: #{_paconv_pallas.1} parent=27 // pred_fallthru
        _
    $region28: #{_paconv_pallas.1} parent=5 // pred_fallthru
      _
    %p161 = scmp.le.s32.totalorder 1, %s10
    %p162 = scmp.lt.s32.totalorder %s10, 3
    %p163 = pnand %p161, %p162
    %p164 = pneg %p163
    // Predicated region
    $region33: #{_paconv_pallas.1} parent=5 // pred_check
      _
    $region34: #{_paconv_pallas.1} parent=5 // pred_check_branch
      %166 = sbr.rel (%p163) target = $region36
    $region35: #{_paconv_pallas.1} parent=5 // pred_region
      %s167 = ssub.s32 %s10, 1
      %p168 = scmp.lt.s32.totalorder %s15, 1
      %s169 = scalar_select %p168, %s15, 1
      %s170 = smul.addr %s169, 2
      %s171 = smul.addr %s170, 4
      %s172 = scalar_lea.vmem %s0, %s171
      %p173 = pneg %p36
      %p174 = pneg %p33
      %p175 = pneg %p57
      %p176 = pneg %p54
      %p177 = pneg %p78
      %p178 = pneg %p75
      %p179 = pneg %p99
      %p180 = pneg %p96
      %p181 = pneg %p125
      %p182 = pneg %p122
      %p183 = scmp.lt.s32.totalorder %s15, 1
      %s184 = scalar_select %p183, %s15, 1
      %s185 = smul.addr %s184, 2
      %s186 = smul.addr %s185, 4
      %s187 = scalar_lea.vmem %s4, %s186
      %p188 = scmp.lt.s32.totalorder %s15, 1
      %s189 = scalar_select %p188, %s15, 1
      %s190 = smul.addr %s189, 2
      %s191 = smul.addr %s190, 4
      %s192 = scalar_lea.vmem %s0, %s191
      %p193 = scmp.lt.s32.totalorder %s15, 1
      %s194 = scalar_select %p193, %s15, 1
      %s195 = smul.addr %s194, 2
      %s196 = smul.addr %s195, 4
      %s197 = scalar_lea.vmem %s4, %s196
      %v198 = vld [vmem:[%s192] sm:$0xff]
      %v199 = vld [vmem:[%s1] sm:$0xff]
      %v200 = vld [vmem:[%s2] sm:$0xf]
      %v201 = vld [vmem:[%s3] sm:$0xf]
      %v202 = vlaneseq
      %v203 = vand.u32 %v202, 127
      %v204 = vadd.s32 %v203, 128
      %v205 = vand.u32 %v203, 255
      %v206 = vand.u32 %v204, 255
      %v207 = vand.u32 %v205, 15
      %v208 = vand.u32 %v206, 15
      %vm209 = vcmp.ge.s32.totalorder %v205, 16
      %vm210 = vcmp.ge.s32.totalorder %v206, 16
      %vm211 = vcmp.lt.s32.totalorder %v205, 240
      %vm212 = vcmp.lt.s32.totalorder %v206, 240
      %vm213 = vcmp.ge.s32.totalorder %v207, 1
      %vm214 = vcmp.ge.s32.totalorder %v208, 1
      %vm215 = vcmp.le.s32.totalorder %v207, 14
      %vm216 = vcmp.le.s32.totalorder %v208, 14
      %vm217 = vmand %vm209, %vm213
      %vm218 = vmand %vm210, %vm214
      %vm219 = vmand %vm209, %vm215
      %vm220 = vmand %vm210, %vm216
      %vm221 = vmand %vm211, %vm213
      %vm222 = vmand %vm212, %vm214
      %vm223 = vmand %vm211, %vm215
      %vm224 = vmand %vm212, %vm216
      %v226 = vcombine.high %v198, %v198
      %228 = vrot.lane.b32.xlu0 %v198, 17
      %v229 = vpop.permute.xlu0 %228
      %230 = vrot.lane.b32.xlu0 %v226, 17
      %v231 = vpop.permute.xlu0 %230
      %vm232 = vcmp.lt.s32.totalorder %v203, 17
      %v233 = vsel %vm232, %v229, %v231
      %v234 = vsel %vm232, %v231, %v229
      %v235 = vsel %vm217, 1, 0
      %v236 = vsel %vm218, 1, 0
      %vm237 = vcmp.eq.s32.totalorder %v235, 1
      %vm238 = vcmp.eq.s32.totalorder %v236, 1
      %v239 = vsel %vm237, %v234, 0.0
      %v240 = vsel %vm238, %v233, 0.0
      %241 = vrot.lane.b32.xlu0 %v198, 16
      %v242 = vpop.permute.xlu0 %241
      %243 = vrot.lane.b32.xlu0 %v226, 16
      %v244 = vpop.permute.xlu0 %243
      %vm245 = vcmp.lt.s32.totalorder %v203, 16
      %v246 = vsel %vm245, %v242, %v244
      %v247 = vsel %vm245, %v244, %v242
      %v248 = vsel %vm209, 1, 0
      %v249 = vsel %vm210, 1, 0
      %vm250 = vcmp.eq.s32.totalorder %v248, 1
      %vm251 = vcmp.eq.s32.totalorder %v249, 1
      %v252 = vsel %vm250, %v247, 0.0
      %v253 = vsel %vm251, %v246, 0.0
      %254 = vrot.lane.b32.xlu0 %v198, 15
      %v255 = vpop.permute.xlu0 %254
      %256 = vrot.lane.b32.xlu0 %v226, 15
      %v257 = vpop.permute.xlu0 %256
      %vm258 = vcmp.lt.s32.totalorder %v203, 15
      %v259 = vsel %vm258, %v255, %v257
      %v260 = vsel %vm258, %v257, %v255
      %v261 = vsel %vm219, 1, 0
      %v262 = vsel %vm220, 1, 0
      %vm263 = vcmp.eq.s32.totalorder %v261, 1
      %vm264 = vcmp.eq.s32.totalorder %v262, 1
      %v265 = vsel %vm263, %v260, 0.0
      %v266 = vsel %vm264, %v259, 0.0
      %267 = vrot.lane.b32.xlu0 %v198, 1
      %v268 = vpop.permute.xlu0 %267
      %269 = vrot.lane.b32.xlu0 %v226, 1
      %v270 = vpop.permute.xlu0 %269
      %vm271 = vcmp.lt.s32.totalorder %v203, 1
      %v272 = vsel %vm271, %v268, %v270
      %v273 = vsel %vm271, %v270, %v268
      %v274 = vsel %vm213, 1, 0
      %v275 = vsel %vm214, 1, 0
      %vm276 = vcmp.eq.s32.totalorder %v274, 1
      %vm277 = vcmp.eq.s32.totalorder %v275, 1
      %v278 = vsel %vm276, %v273, 0.0
      %v279 = vsel %vm277, %v272, 0.0
      %280 = vrot.lane.b32.xlu0 %v198, 127
      %v281 = vpop.permute.xlu0 %280
      %282 = vrot.lane.b32.xlu0 %v226, 127
      %v283 = vpop.permute.xlu0 %282
      %vm284 = vcmp.lt.s32.totalorder %v203, 127
      %v285 = vsel %vm284, %v281, %v283
      %v286 = vsel %vm284, %v283, %v281
      %v287 = vsel %vm215, 1, 0
      %v288 = vsel %vm216, 1, 0
      %vm289 = vcmp.eq.s32.totalorder %v287, 1
      %vm290 = vcmp.eq.s32.totalorder %v288, 1
      %v291 = vsel %vm289, %v285, 0.0
      %v292 = vsel %vm290, %v286, 0.0
      %293 = vrot.lane.b32.xlu0 %v198, 113
      %v294 = vpop.permute.xlu0 %293
      %295 = vrot.lane.b32.xlu0 %v226, 113
      %v296 = vpop.permute.xlu0 %295
      %vm297 = vcmp.lt.s32.totalorder %v203, 113
      %v298 = vsel %vm297, %v294, %v296
      %v299 = vsel %vm297, %v296, %v294
      %v300 = vsel %vm221, 1, 0
      %v301 = vsel %vm222, 1, 0
      %vm302 = vcmp.eq.s32.totalorder %v300, 1
      %vm303 = vcmp.eq.s32.totalorder %v301, 1
      %v304 = vsel %vm302, %v298, 0.0
      %v305 = vsel %vm303, %v299, 0.0
      %306 = vrot.lane.b32.xlu0 %v198, 112
      %v307 = vpop.permute.xlu0 %306
      %308 = vrot.lane.b32.xlu0 %v226, 112
      %v309 = vpop.permute.xlu0 %308
      %vm310 = vcmp.lt.s32.totalorder %v203, 112
      %v311 = vsel %vm310, %v307, %v309
      %v312 = vsel %vm310, %v309, %v307
      %v313 = vsel %vm211, 1, 0
      %v314 = vsel %vm212, 1, 0
      %vm315 = vcmp.eq.s32.totalorder %v313, 1
      %vm316 = vcmp.eq.s32.totalorder %v314, 1
      %v317 = vsel %vm315, %v311, 0.0
      %v318 = vsel %vm316, %v312, 0.0
      %319 = vrot.lane.b32.xlu0 %v198, 111
      %v320 = vpop.permute.xlu0 %319
      %321 = vrot.lane.b32.xlu0 %v226, 111
      %v322 = vpop.permute.xlu0 %321
      %vm323 = vcmp.lt.s32.totalorder %v203, 111
      %v324 = vsel %vm323, %v320, %v322
      %v325 = vsel %vm323, %v322, %v320
      %v326 = vsel %vm223, 1, 0
      %v327 = vsel %vm224, 1, 0
      %vm328 = vcmp.eq.s32.totalorder %v326, 1
      %vm329 = vcmp.eq.s32.totalorder %v327, 1
      %v330 = vsel %vm328, %v324, 0.0
      %v331 = vsel %vm329, %v325, 0.0
      %v334 = vrot.slane %v252, 4
      %v335 = vrot.slane %v253, 4
      %v340 = vrot.slane %v278, 4
      %v341 = vrot.slane %v279, 4
      %v346 = vrot.slane %v291, 4
      %v347 = vrot.slane %v292, 4
      %v352 = vrot.slane %v317, 4
      %v353 = vrot.slane %v318, 4
      %vm356 = vcmask 1043456
      %v357 = vsel %vm356, %v239, %v334
      %v358 = vsel %vm356, %v240, %v335
      %v359 = vsel %vm356, %v265, %v340
      %v360 = vsel %vm356, %v266, %v341
      %v361 = vsel %vm356, %v198, %v346
      %v362 = vsel %vm356, %v226, %v347
      %v363 = vsel %vm356, %v304, %v352
      %v364 = vsel %vm356, %v305, %v353
      %vm365 = vcmask 293888
      %v367 = vsel %vm365, %v199, 0
      %v370 = vsel %vm356, %v330, 0
      %v373 = vsel %vm356, %v331, 0
      %375 = vmatprep.subr.mxu0 %v358
      %376 = vmatpush1.msra.mxu0 %v357
      %377 = vmatprep.subr.mxu0 %v360
      %378 = vmatpush1.msra.mxu0 %v359
      %379 = vmatprep.subr.mxu0 %v362
      %380 = vmatpush1.msra.mxu0 %v361
      %381 = vmatprep.subr.mxu0 %v364
      %382 = vmatpush1.msra.mxu0 %v363
      %383 = vmatprep.subr.mxu0 %v373
      %384 = vmatpush1.msra.mxu0 %v370
      %385 = vmatprep.subr.mxu0 0.0
      %386 = vmatpush1.msra.mxu0 0.0
      %387 = vmatprep.subr.mxu0 0.0
      %388 = vmatpush1.msra.mxu0 0.0
      %389 = vmatprep.subr.mxu0 0.0
      %390 = vmatpush1.msra.mxu0 0.0
      %391 = vmatprep.subr.mxu0 0.0
      %392 = vmatpush1.msra.mxu0 0.0
      %393 = vmatprep.subr.mxu0 0.0
      %394 = vmatpush1.msra.mxu0 0.0
      %395 = vmatprep.subr.mxu0 0.0
      %396 = vmatpush1.msra.mxu0 0.0
      %397 = vmatprep.subr.mxu0 0.0
      %398 = vmatpush1.msra.mxu0 0.0
      %399 = vmatprep.subr.mxu0 0.0
      %400 = vmatpush1.msra.mxu0 0.0
      %401 = vmatprep.subr.mxu0 0.0
      %402 = vmatpush1.msra.mxu0 0.0
      %403 = vmatprep.subr.mxu0 0.0
      %404 = vmatpush1.msra.mxu0 0.0
      %405 = vmatprep.subr.mxu0 0.0
      %406 = vmatpush1.msra.mxu0 0.0
      %407 = vmatprep.subr.mxu0 0.0
      %408 = vmatpush1.msra.mxu0 0.0
      %409 = vmatprep.subr.mxu0 0.0
      %410 = vmatpush1.msra.mxu0 0.0
      %411 = vmatprep.subr.mxu0 0.0
      %412 = vmatpush1.msra.mxu0 0.0
      %413 = vmatprep.subr.mxu0 0.0
      %414 = vmatpush1.msra.mxu0 0.0
      %415 = vmatprep.subr.mxu0 0.0
      %416 = vmatpush1.msra.mxu0 0.0
      %417 = vmatprep.subr.mxu0 0.0
      %418 = vmatpush1.msra.mxu0 0.0
      %419 = vmatprep.subr.mxu0 0.0
      %420 = vmatpush1.msra.mxu0 0.0
      %421 = vmatprep.subr.mxu0 0.0
      %422 = vmatpush1.msra.mxu0 0.0
      %423 = vmatprep.subr.mxu0 0.0
      %424 = vmatpush1.msra.mxu0 0.0
      %425 = vmatprep.subr.mxu0 0.0
      %426 = vmatpush1.msra.mxu0 0.0
      %427 = vmatprep.subr.mxu0 0.0
      %428 = vmatpush1.msra.mxu0 0.0
      %429 = vmatprep.subr.mxu0 0.0
      %430 = vmatpush1.msra.mxu0 0.0
      %431 = vmatprep.subr.mxu0 0.0
      %432 = vmatpush1.msra.mxu0 0.0
      %433 = vmatprep.subr.mxu0 0.0
      %434 = vmatpush1.msra.mxu0 0.0
      %435 = vmatprep.subr.mxu0 0.0
      %436 = vmatpush1.msra.mxu0 0.0
      %437 = vmatprep.subr.mxu0 0.0
      %438 = vmatpush1.msra.mxu0 0.0
      %439 = vmatprep.mubr.f32.mxu0 0.0
      %440 = vmatmul.mubr.f32.gmra.mrb[0].mxu0 %v367
      %v441 = vpop.f32.mrb[0].mxu0
      %v442 = vadd.f32 0.0, %v441
      %v443 = vpop.f32.mrb[0].mxu0
      %v444 = vadd.f32 0.0, %v443
      %445 = vdwg.mxu0
      %447 = vset.pattern.permute.xlu0 0
      %448 = vperm.xlu0 %447, %v200
      %v449 = vpop.permute.xlu0 %448
      %v450 = vrot.slane %v449, 4
      %v452 = vadd.f32 %v442, %v450
      %v453 = vadd.f32 %v444, %v450
      %v454 = vxor.u32 %v452, 2147483648
      %v455 = vxor.u32 %v453, 2147483648
      %v456 = vmul.f32 %v454, 1.442695
      %v457 = vpow.pop %v456
      %v458 = vmul.f32 %v455, 1.442695
      %v459 = vpow.pop %v458
      %v460 = vadd.f32 %v457, 1.0
      %v461 = vadd.f32 %v459, 1.0
      %v462 = vrcp.pop %v460
      %v463 = vmul.f32 1.0, %v462
      %v464 = vrcp.pop %v461
      %v465 = vmul.f32 1.0, %v464
      %v468 = vrot.slane %v463, 4
      %v469 = vrot.slane %v465, 4
      %v472 = vmul.f32 %v442, %v468
      %v473 = vmul.f32 %v444, %v469
      %474 = vrot.lane.b32.xlu0 %v472, 17
      %v475 = vpop.permute.xlu0 %474
      %476 = vrot.lane.b32.xlu0 %v473, 17
      %v477 = vpop.permute.xlu0 %476
      %v478 = vsel %vm232, %v475, %v477
      %v479 = vsel %vm232, %v477, %v475
      %v480 = vsel %vm237, %v479, 0.0
      %v481 = vsel %vm238, %v478, 0.0
      %482 = vrot.lane.b32.xlu0 %v472, 16
      %v483 = vpop.permute.xlu0 %482
      %484 = vrot.lane.b32.xlu0 %v473, 16
      %v485 = vpop.permute.xlu0 %484
      %v486 = vsel %vm245, %v483, %v485
      %v487 = vsel %vm245, %v485, %v483
      %v488 = vsel %vm250, %v487, 0.0
      %v489 = vsel %vm251, %v486, 0.0
      %490 = vrot.lane.b32.xlu0 %v472, 15
      %v491 = vpop.permute.xlu0 %490
      %492 = vrot.lane.b32.xlu0 %v473, 15
      %v493 = vpop.permute.xlu0 %492
      %v494 = vsel %vm258, %v491, %v493
      %v495 = vsel %vm258, %v493, %v491
      %v496 = vsel %vm263, %v495, 0.0
      %v497 = vsel %vm264, %v494, 0.0
      %498 = vrot.lane.b32.xlu0 %v472, 1
      %v499 = vpop.permute.xlu0 %498
      %500 = vrot.lane.b32.xlu0 %v473, 1
      %v501 = vpop.permute.xlu0 %500
      %v502 = vsel %vm271, %v499, %v501
      %v503 = vsel %vm271, %v501, %v499
      %v504 = vsel %vm276, %v503, 0.0
      %v505 = vsel %vm277, %v502, 0.0
      %506 = vrot.lane.b32.xlu0 %v472, 127
      %v507 = vpop.permute.xlu0 %506
      %508 = vrot.lane.b32.xlu0 %v473, 127
      %v509 = vpop.permute.xlu0 %508
      %v510 = vsel %vm284, %v507, %v509
      %v511 = vsel %vm284, %v509, %v507
      %v512 = vsel %vm289, %v510, 0.0
      %v513 = vsel %vm290, %v511, 0.0
      %514 = vrot.lane.b32.xlu0 %v472, 113
      %v515 = vpop.permute.xlu0 %514
      %516 = vrot.lane.b32.xlu0 %v473, 113
      %v517 = vpop.permute.xlu0 %516
      %v518 = vsel %vm297, %v515, %v517
      %v519 = vsel %vm297, %v517, %v515
      %v520 = vsel %vm302, %v518, 0.0
      %v521 = vsel %vm303, %v519, 0.0
      %522 = vrot.lane.b32.xlu0 %v472, 112
      %v523 = vpop.permute.xlu0 %522
      %524 = vrot.lane.b32.xlu0 %v473, 112
      %v525 = vpop.permute.xlu0 %524
      %v526 = vsel %vm310, %v523, %v525
      %v527 = vsel %vm310, %v525, %v523
      %v528 = vsel %vm315, %v526, 0.0
      %v529 = vsel %vm316, %v527, 0.0
      %530 = vrot.lane.b32.xlu0 %v472, 111
      %v531 = vpop.permute.xlu0 %530
      %532 = vrot.lane.b32.xlu0 %v473, 111
      %v533 = vpop.permute.xlu0 %532
      %v534 = vsel %vm323, %v531, %v533
      %v535 = vsel %vm323, %v533, %v531
      %v536 = vsel %vm328, %v534, 0.0
      %v537 = vsel %vm329, %v535, 0.0
      %v540 = vrot.slane %v488, 4
      %v541 = vrot.slane %v489, 4
      %v546 = vrot.slane %v504, 4
      %v547 = vrot.slane %v505, 4
      %v552 = vrot.slane %v512, 4
      %v553 = vrot.slane %v513, 4
      %v558 = vrot.slane %v528, 4
      %v559 = vrot.slane %v529, 4
      %v562 = vsel %vm356, %v480, %v540
      %v563 = vsel %vm356, %v481, %v541
      %v564 = vsel %vm356, %v496, %v546
      %v565 = vsel %vm356, %v497, %v547
      %v566 = vsel %vm356, %v472, %v552
      %v567 = vsel %vm356, %v473, %v553
      %v568 = vsel %vm356, %v520, %v558
      %v569 = vsel %vm356, %v521, %v559
      %v571 = vsel %vm365, %v201, 0
      %v574 = vsel %vm356, %v536, 0
      %v577 = vsel %vm356, %v537, 0
      %579 = vmatprep.subr.mxu0 %v563
      %580 = vmatpush1.msra.mxu0 %v562
      %581 = vmatprep.subr.mxu0 %v565
      %582 = vmatpush1.msra.mxu0 %v564
      %583 = vmatprep.subr.mxu0 %v567
      %584 = vmatpush1.msra.mxu0 %v566
      %585 = vmatprep.subr.mxu0 %v569
      %586 = vmatpush1.msra.mxu0 %v568
      %587 = vmatprep.subr.mxu0 %v577
      %588 = vmatpush1.msra.mxu0 %v574
      %589 = vmatprep.subr.mxu0 0.0
      %590 = vmatpush1.msra.mxu0 0.0
      %591 = vmatprep.subr.mxu0 0.0
      %592 = vmatpush1.msra.mxu0 0.0
      %593 = vmatprep.subr.mxu0 0.0
      %594 = vmatpush1.msra.mxu0 0.0
      %595 = vmatprep.subr.mxu0 0.0
      %596 = vmatpush1.msra.mxu0 0.0
      %597 = vmatprep.subr.mxu0 0.0
      %598 = vmatpush1.msra.mxu0 0.0
      %599 = vmatprep.subr.mxu0 0.0
      %600 = vmatpush1.msra.mxu0 0.0
      %601 = vmatprep.subr.mxu0 0.0
      %602 = vmatpush1.msra.mxu0 0.0
      %603 = vmatprep.subr.mxu0 0.0
      %604 = vmatpush1.msra.mxu0 0.0
      %605 = vmatprep.subr.mxu0 0.0
      %606 = vmatpush1.msra.mxu0 0.0
      %607 = vmatprep.subr.mxu0 0.0
      %608 = vmatpush1.msra.mxu0 0.0
      %609 = vmatprep.subr.mxu0 0.0
      %610 = vmatpush1.msra.mxu0 0.0
      %611 = vmatprep.subr.mxu0 0.0
      %612 = vmatpush1.msra.mxu0 0.0
      %613 = vmatprep.subr.mxu0 0.0
      %614 = vmatpush1.msra.mxu0 0.0
      %615 = vmatprep.subr.mxu0 0.0
      %616 = vmatpush1.msra.mxu0 0.0
      %617 = vmatprep.subr.mxu0 0.0
      %618 = vmatpush1.msra.mxu0 0.0
      %619 = vmatprep.subr.mxu0 0.0
      %620 = vmatpush1.msra.mxu0 0.0
      %621 = vmatprep.subr.mxu0 0.0
      %622 = vmatpush1.msra.mxu0 0.0
      %623 = vmatprep.subr.mxu0 0.0
      %624 = vmatpush1.msra.mxu0 0.0
      %625 = vmatprep.subr.mxu0 0.0
      %626 = vmatpush1.msra.mxu0 0.0
      %627 = vmatprep.subr.mxu0 0.0
      %628 = vmatpush1.msra.mxu0 0.0
      %629 = vmatprep.subr.mxu0 0.0
      %630 = vmatpush1.msra.mxu0 0.0
      %631 = vmatprep.subr.mxu0 0.0
      %632 = vmatpush1.msra.mxu0 0.0
      %633 = vmatprep.subr.mxu0 0.0
      %634 = vmatpush1.msra.mxu0 0.0
      %635 = vmatprep.subr.mxu0 0.0
      %636 = vmatpush1.msra.mxu0 0.0
      %637 = vmatprep.subr.mxu0 0.0
      %638 = vmatpush1.msra.mxu0 0.0
      %639 = vmatprep.subr.mxu0 0.0
      %640 = vmatpush1.msra.mxu0 0.0
      %641 = vmatprep.subr.mxu0 0.0
      %642 = vmatpush1.msra.mxu0 0.0
      %643 = vmatprep.mubr.f32.mxu0 0.0
      %644 = vmatmul.mubr.f32.gmra.mrb[0].mxu0 %v571
      %v645 = vpop.f32.mrb[0].mxu0
      %v646 = vadd.f32 0.0, %v645
      %v647 = vpop.f32.mrb[0].mxu0
      %v648 = vadd.f32 0.0, %v647
      %649 = vdwg.mxu0
      %v652 = vcombine.low %v646, %v648
      %654 = vst [vmem:[%s197] sm:$0xff] %v652
      %p655 = scmp.lt.s32.totalorder %s15, 1
      %s656 = scalar_select %p655, %s15, 1
      %s657 = smul.addr %s656, 2
      %s658 = smul.addr %s657, 4
      %s659 = scalar_lea.vmem %s4, %s658
      // Predicated region
      $region37: #{_paconv_pallas.1} parent=35 // pred_check
        %p660 = pneg %p122
      $region38: #{_paconv_pallas.1} parent=35 // pred_check_branch
        %662 = sbr.rel (%p660) target = $region40
      $region39: #{_paconv_pallas.1} parent=35 // pred_region
        _
      $region40: #{_paconv_pallas.1} parent=35 // pred_fallthru
        _
    $region36: #{_paconv_pallas.1} parent=5 // pred_fallthru
      _
    %p663 = scmp.le.s32.totalorder 2, %s10
    // Predicated region
    $region41: #{_paconv_pallas.1} parent=5 // pred_check
      %p664 = pneg %p663
    $region42: #{_paconv_pallas.1} parent=5 // pred_check_branch
      %666 = sbr.rel (%p664) target = $region44
    $region43: #{_paconv_pallas.1} parent=5 // pred_region
      %s667 = ssub.s32 %s10, 2
      // Predicated region
      $region45: #{_paconv_pallas.1} parent=43 // pred_check
        %p668 = pneg %p128
      $region46: #{_paconv_pallas.1} parent=43 // pred_check_branch
        %670 = sbr.rel (%p668) target = $region48
      $region47: #{_paconv_pallas.1} parent=43 // pred_region
        %p671 = scmp.lt.s32.totalorder %s16, 1
        %s672 = scalar_select %p671, %s16, 1
        %s673 = smul.addr %s672, 2
        %s674 = smul.addr %s673, 4
        %s675 = scalar_lea.vmem %s4, %s674
      $region48: #{_paconv_pallas.1} parent=43 // pred_fallthru
        _
    $region44: #{_paconv_pallas.1} parent=5 // pred_fallthru
      _
  $region6: #{_paconv_pallas.1} parent=0 // loop_footer
    %s14 = sadd.s32 1, %s10
  $region7: #{_paconv_pallas.1} parent=0 // loop_footer_branch
    %9 = sbr.rel target = $region3
  $region8: #{_paconv_pallas.1} parent=0 // loop_exit
    _

</llo_original>
